<compile_context>
chip_gen: v6e
topology: v6e:2x2x1
jax: 0.10.0
libtpu: 0.0.40
codegen_flags: <defaults>
</compile_context>

<pallas_src>
import functools

import jax
import jax.numpy as jnp
from jax.experimental import pallas as pl
from jax.experimental.pallas import tpu as pltpu


def _gesd_kernel(f1_ref, f2_ref, out_ref, *, gamma, c, approx_recip):
    # One (tb, D) tile per grid step: elementwise on the VPU, row reduction on
    # the XLU, exp / reciprocal on the EUP -- all hidden under the input DMA.
    f1 = f1_ref[...].astype(jnp.float32)
    f2 = f2_ref[...].astype(jnp.float32)

    diff = f1 - f2
    l2 = jnp.sum(diff * diff, axis=1, keepdims=True)       # (tb, 1)
    dot = jnp.sum(f1 * f2, axis=1, keepdims=True)          # (tb, 1)

    if approx_recip:
        euclidean = pl.reciprocal(1.0 + l2, approx=True)
        sigmoid = pl.reciprocal(1.0 + jnp.exp(-gamma * (dot + c)), approx=True)
    else:
        euclidean = 1.0 / (1.0 + l2)
        sigmoid = 1.0 / (1.0 + jnp.exp(-gamma * (dot + c)))

    out_ref[...] = (euclidean * sigmoid).astype(out_ref.dtype)


def _round_up(x, m):
    return (x + m - 1) // m * m


# ~3 MiB per input per pipeline buffer: 2 inputs x 2 buffers = 12 MiB, which is
# inside the scoped-VMEM budget on v5e/v6e/v7x and well past the measured tile
# size where the BlockSpec DMA pipeline reaches ~85% of HBM roofline.
_TARGET_TILE_BYTES = 3 * 1024 * 1024
_VMEM_LIMIT_BYTES = 32 * 1024 * 1024   # <= physical VMEM on v5e/v6e/v7x


def gesd(f1, f2, *, gamma=1.0, c=1.0, block_b=None, approx_recip=True):
    """Pallas implementation of Gesd.forward (reduction over dim=1).

    f1, f2: (B, D) arrays (float32 or bfloat16). Returns a float32 (B,) array.
    """
    assert f1.shape == f2.shape and f1.ndim == 2, "expected matching (B, D) inputs"
    B, D = f1.shape
    itemsize = jnp.dtype(f1.dtype).itemsize
    # Minimum sublane granularity of the block's second-minor dim (8 for f32,
    # 16 for bf16, 32 for 1-byte dtypes).
    min_rows = max(8, 32 // itemsize)

    if block_b is None:
        tb = max(min_rows, _TARGET_TILE_BYTES // max(1, D * itemsize))
        if tb >= 128:
            tb = (tb // 128) * 128          # keep large tiles lane/sublane friendly
        else:
            tb = (tb // min_rows) * min_rows
    else:
        tb = block_b
    # Never use a tile taller than the (padded) batch itself.
    tb = min(tb, _round_up(B, min_rows))
    tb = max(min_rows, (tb // min_rows) * min_rows)

    tile_bytes = tb * D * itemsize
    assert 4 * tile_bytes <= _VMEM_LIMIT_BYTES, (
        "feature dim too large for a single (tb, D) tile")
    # TODO(synk): for very large D, add a second ("arbitrary") grid axis over D
    # with a small VMEM accumulator instead of shrinking tb down to 8 rows.

    B_pad = _round_up(B, tb)
    if B_pad != B:
        pad = B_pad - B
        f1 = jnp.pad(f1, ((0, pad), (0, 0)))
        f2 = jnp.pad(f2, ((0, pad), (0, 0)))

    kernel = functools.partial(
        _gesd_kernel, gamma=float(gamma), c=float(c), approx_recip=approx_recip)

    out2d = pl.pallas_call(
        kernel,
        out_shape=jax.ShapeDtypeStruct((B_pad, 1), jnp.float32),
        grid_spec=pltpu.PrefetchScalarGridSpec(
            num_scalar_prefetch=0,
            grid=(B_pad // tb,),
            in_specs=[
                pl.BlockSpec((tb, D), lambda i: (i, 0)),
                pl.BlockSpec((tb, D), lambda i: (i, 0)),
            ],
            out_specs=pl.BlockSpec((tb, 1), lambda i: (i, 0)),
        ),
        compiler_params=pltpu.CompilerParams(
            dimension_semantics=("parallel",),
            vmem_limit_bytes=_VMEM_LIMIT_BYTES,
        ),
    )(f1, f2)
    return out2d[:B, 0]


def _gesd_ref(f1, f2, gamma=1.0, c=1.0):
    f1 = f1.astype(jnp.float32)
    f2 = f2.astype(jnp.float32)
    l2 = jnp.sum((f1 - f2) ** 2, axis=1)
    euclidean = 1.0 / (1.0 + l2)
    sigmoid = 1.0 / (1.0 + jnp.exp(-gamma * (jnp.sum(f1 * f2, axis=1) + c)))
    return euclidean * sigmoid


if __name__ == "__main__":
    key = jax.random.PRNGKey(0)
    k1, k2, k3, k4, k5, k6 = jax.random.split(key, 6)

    # Case 1: small f32, exact reciprocals -> tight tolerance.
    B, D = 8, 128
    f1 = jax.random.normal(k1, (B, D), dtype=jnp.float32)
    f2 = jax.random.normal(k2, (B, D), dtype=jnp.float32)
    out = jax.block_until_ready(gesd(f1, f2, gamma=1.0, c=1.0, approx_recip=False))
    ref = _gesd_ref(f1, f2)
    assert out.shape == (B,)
    assert jnp.allclose(out, ref, atol=1e-5, rtol=1e-5), (out, ref)

    # Case 1b: same inputs, EUP approximate reciprocals -> looser tolerance.
    out_fast = jax.block_until_ready(gesd(f1, f2, gamma=1.0, c=1.0))
    assert jnp.allclose(out_fast, ref, atol=1e-2, rtol=1e-2), (out_fast, ref)

    # Case 2: ragged batch / non-128 feature dim (padded internally).
    B2, D2 = 37, 96
    g1 = jax.random.normal(k3, (B2, D2), dtype=jnp.float32)
    g2 = jax.random.normal(k4, (B2, D2), dtype=jnp.float32)
    out2 = jax.block_until_ready(gesd(g1, g2, gamma=0.5, c=2.0))
    ref2 = _gesd_ref(g1, g2, gamma=0.5, c=2.0)
    assert out2.shape == (B2,)
    assert jnp.allclose(out2, ref2, atol=1e-2, rtol=1e-2), (out2, ref2)

    # Case 3: bf16 inputs (halves HBM traffic), f32 math in-kernel.
    B3, D3 = 16, 256
    h1 = jax.random.normal(k5, (B3, D3), dtype=jnp.bfloat16)
    h2 = jax.random.normal(k6, (B3, D3), dtype=jnp.bfloat16)
    out3 = jax.block_until_ready(gesd(h1, h2))
    ref3 = _gesd_ref(h1, h2)
    assert out3.shape == (B3,)
    assert jnp.allclose(out3, ref3, atol=2e-2, rtol=2e-2), (out3, ref3)

    print("KERNEL_OK")
</pallas_src>

<mosaic_0001>
module attributes {stable_mosaic.version = 11 : i64} {
  func.func @_gesd_kernel(%arg0: i32, %arg1: memref<8x128xf32, #tpu.memory_space<vmem>>, %arg2: memref<8x128xf32, #tpu.memory_space<vmem>>, %arg3: memref<8x1xf32, #tpu.memory_space<vmem>>) attributes {dimension_semantics = [#tpu.dimension_semantics<parallel>], iteration_bounds = array<i64: 1>, scalar_prefetch = 0 : i64, scratch_operands = 0 : i64, tpu.core_type = #tpu.core_type<tc>, window_params = [{transform_indices = @transform_0, window_bounds = array<i64: 8, 128>}, {transform_indices = @transform_1, window_bounds = array<i64: 8, 128>}, {transform_indices = @transform_2, window_bounds = array<i64: 8, 1>}]} {
    %c0 = arith.constant 0 : index
    %c0_0 = arith.constant 0 : index
    %0 = vector.load %arg1[%c0, %c0_0] : memref<8x128xf32, #tpu.memory_space<vmem>>, vector<8x128xf32>
    %c0_1 = arith.constant 0 : index
    %c0_2 = arith.constant 0 : index
    %1 = vector.load %arg2[%c0_1, %c0_2] : memref<8x128xf32, #tpu.memory_space<vmem>>, vector<8x128xf32>
    %2 = arith.subf %0, %1 : vector<8x128xf32>
    %3 = arith.mulf %2, %2 : vector<8x128xf32>
    %cst = arith.constant dense<0.000000e+00> : vector<8xf32>
    %4 = vector.multi_reduction <add>, %3, %cst [1] : vector<8x128xf32> to vector<8xf32>
    %5 = vector.shape_cast %4 : vector<8xf32> to vector<8x1xf32>
    %6 = arith.mulf %0, %1 : vector<8x128xf32>
    %cst_3 = arith.constant dense<0.000000e+00> : vector<8xf32>
    %7 = vector.multi_reduction <add>, %6, %cst_3 [1] : vector<8x128xf32> to vector<8xf32>
    %8 = vector.shape_cast %7 : vector<8xf32> to vector<8x1xf32>
    %cst_4 = arith.constant 1.000000e+00 : f32
    %9 = vector.broadcast %cst_4 : f32 to vector<8x1xf32>
    %10 = arith.addf %9, %5 : vector<8x1xf32>
    %cst_5 = arith.constant 1.000000e+00 : f32
    %11 = vector.broadcast %cst_5 : f32 to vector<8x1xf32>
    %12 = arith.divf %11, %10 : vector<8x1xf32>
    %cst_6 = arith.constant 1.000000e+00 : f32
    %13 = vector.broadcast %cst_6 : f32 to vector<8x1xf32>
    %14 = arith.addf %8, %13 : vector<8x1xf32>
    %cst_7 = arith.constant -1.000000e+00 : f32
    %15 = vector.broadcast %cst_7 : f32 to vector<8x1xf32>
    %16 = arith.mulf %15, %14 : vector<8x1xf32>
    %17 = math.exp %16 : vector<8x1xf32>
    %cst_8 = arith.constant 1.000000e+00 : f32
    %18 = vector.broadcast %cst_8 : f32 to vector<8x1xf32>
    %19 = arith.addf %18, %17 : vector<8x1xf32>
    %cst_9 = arith.constant 1.000000e+00 : f32
    %20 = vector.broadcast %cst_9 : f32 to vector<8x1xf32>
    %21 = arith.divf %20, %19 : vector<8x1xf32>
    %22 = arith.mulf %12, %21 : vector<8x1xf32>
    %c0_10 = arith.constant 0 : index
    %c0_11 = arith.constant 0 : index
    %23 = vector.load %arg3[%c0_10, %c0_11] : memref<8x1xf32, #tpu.memory_space<vmem>>, vector<8x1xf32>
    tpu.vector_store %arg3[%c0_10, %c0_11], %22 {strides = array<i32>} : memref<8x1xf32, #tpu.memory_space<vmem>>, vector<8x1xf32>,
    return
  }
  func.func @transform_0(%arg0: i32) -> (i32, i32) {
    %c0_i32 = arith.constant 0 : i32
    %c0_i32_0 = arith.constant 0 : i32
    return %arg0, %c0_i32 : i32, i32
  }
  func.func @transform_1(%arg0: i32) -> (i32, i32) {
    %c0_i32 = arith.constant 0 : i32
    %c0_i32_0 = arith.constant 0 : i32
    return %arg0, %c0_i32 : i32, i32
  }
  func.func @transform_2(%arg0: i32) -> (i32, i32) {
    %c0_i32 = arith.constant 0 : i32
    %c0_i32_0 = arith.constant 0 : i32
    return %arg0, %c0_i32 : i32, i32
  }
}

</mosaic_0001>

<llo_original>
// kernel: tpu_custom_call.1
$region0: #{tpu_custom_call.1}
  #allocation0 [shape = 'u32[]', space=smem, size = 0x4, offset = 0x4, fixed_abs, tag = 'smem constant byte address 0x4 - core index']
  #allocation1 [shape = 'u32[144,128]{1,0:T(1,128)}', space=vmem, size = 0x12000, scoped, tag = 'internal scratch']
  %s0 = inlined_call_operand.hbm [shape: f32[8,128], index: 0, kind: input, shape index: {}]
  %s1 = inlined_call_operand.hbm [shape: f32[8,128], index: 1, kind: input, shape index: {}]
  %s2 = inlined_call_operand.vmem [shape: f32[8,1], index: 2, kind: output, shape index: {}]
  %s3 = sld [smem:[#allocation0]]
  $region26: #{tpu_custom_call.1} parent=0
    _
  %s5 = ssub.s32 1, %s3
  %s6 = scalar_select 0, %s5, %s3
  $region1: #{tpu_custom_call.1} parent=0
    #allocation2 [shape = 'u8[4096]{0}', space=vmem, size = 0x1000, scoped, tag = 'input window, operand 0, single buffered']
    #allocation3 [shape = 's32[1]{0}', space=sflag, size = 0x4, scoped, tag = 'scoped memory for tpu_custom_call.1']
    #allocation4 [shape = 'u8[4096]{0}', space=vmem, size = 0x1000, scoped, tag = 'input window, operand 1, single buffered']
    #allocation5 [shape = 's32[1]{0}', space=sflag, size = 0x4, scoped, tag = 'scoped memory for tpu_custom_call.1']
    %7 = vsyncpa [#allocation3], 0
    %8 = vsyncpa [#allocation5], 0
    // Predicated region
    $region2: #{tpu_custom_call.1} parent=1 // pred_check
      _
    $region3: #{tpu_custom_call.1} parent=1 // pred_check_branch
      %10 = sbr.rel (0) target = $region5
    $region4: #{tpu_custom_call.1} parent=1 // pred_region
      %s12 = ssub.s32 128, 128
      %13 = vsyncadd [#allocation3], %s12
      %s15 = sshll.u32 [#allocation2], 4
      %s16 = int_to_ptr.vmem [resolvable:$true] %s15
      %18 = dma.hbm_to_vmem [thread:$0]  %s0, 128, %s16, [#allocation3]
    $region5: #{tpu_custom_call.1} parent=1 // pred_fallthru
      _
    // Predicated region
    $region6: #{tpu_custom_call.1} parent=1 // pred_check
      _
    $region7: #{tpu_custom_call.1} parent=1 // pred_check_branch
      %20 = sbr.rel (0) target = $region9
    $region8: #{tpu_custom_call.1} parent=1 // pred_region
      %s22 = ssub.s32 128, 128
      %23 = vsyncadd [#allocation5], %s22
      %s25 = sshll.u32 [#allocation4], 4
      %s26 = int_to_ptr.vmem [resolvable:$true] %s25
      %28 = dma.hbm_to_vmem [thread:$0]  %s1, 128, %s26, [#allocation5]
    $region9: #{tpu_custom_call.1} parent=1 // pred_fallthru
      _
    // Predicated region
    $region10: #{tpu_custom_call.1} parent=1 // pred_check
      _
    $region11: #{tpu_custom_call.1} parent=1 // pred_check_branch
      %30 = sbr.rel (0) target = $region13
    $region12: #{tpu_custom_call.1} parent=1 // pred_region
      %31 = dma.done [#allocation3], 128
    $region13: #{tpu_custom_call.1} parent=1 // pred_fallthru
      _
    // Predicated region
    $region14: #{tpu_custom_call.1} parent=1 // pred_check
      _
    $region15: #{tpu_custom_call.1} parent=1 // pred_check_branch
      %33 = sbr.rel (0) target = $region17
    $region16: #{tpu_custom_call.1} parent=1 // pred_region
      %34 = dma.done [#allocation5], 128
    $region17: #{tpu_custom_call.1} parent=1 // pred_fallthru
      _
    %v35 = vld [vmem:[#allocation2] sm:$0xff]
    %v36 = vld [vmem:[#allocation4] sm:$0xff]
    %v37 = vsub.f32 %v35, %v36
    %v38 = vmul.f32 %v37, %v37
    %39 = vadd.xlane.f32.xlu0 %v38
    %v40 = vpop.xlane.xlu0 %39
    %v41 = vmul.f32 %v35, %v36
    %42 = vadd.xlane.f32.xlu0 %v41
    %v43 = vpop.xlane.xlu0 %42
    %v44 = vadd.f32 %v40, 1.0
    %v45 = vrcp.pop %v44
    %v46 = vmul.f32 1.0, %v45
    %v47 = vadd.f32 %v43, 1.0
    %v48 = vmul.f32 %v47, -1.0
    %v49 = vmul.f32 %v48, 1.442695
    %v50 = vpow.pop %v49
    %v51 = vadd.f32 %v50, 1.0
    %v52 = vrcp.pop %v51
    %v53 = vmul.f32 1.0, %v52
    %v54 = vmul.f32 %v46, %v53
    %vm55 = vcmask 7168
    %56 = vst.msk [vmem:[%s2] sm:$0xff] %vm55, %v54
    // Predicated region
    $region18: #{tpu_custom_call.1} parent=1 // pred_check
      _
    $region19: #{tpu_custom_call.1} parent=1 // pred_check_branch
      %58 = sbr.rel (0) target = $region21
    $region20: #{tpu_custom_call.1} parent=1 // pred_region
      _
    $region21: #{tpu_custom_call.1} parent=1 // pred_fallthru
      _
    // Predicated region
    $region22: #{tpu_custom_call.1} parent=1 // pred_check
      _
    $region23: #{tpu_custom_call.1} parent=1 // pred_check_branch
      %60 = sbr.rel (0) target = $region25
    $region24: #{tpu_custom_call.1} parent=1 // pred_region
      _
    $region25: #{tpu_custom_call.1} parent=1 // pred_fallthru
      _
    %61 = vsyncpa [#allocation3], 1
    %62 = vsyncpa [#allocation5], 1

</llo_original>
